<compile_context>
chip_gen: v7x
topology: tpu7x:2x2x1
jax: 0.10.0
libtpu: 0.0.40
codegen_flags: <defaults>
</compile_context>

<pallas_src>
import functools

import jax
import jax.numpy as jnp
from jax.experimental import pallas as pl
from jax.experimental.pallas import tpu as pltpu


def _concat_linear_kernel(x1_ref, x2_ref, w1a_ref, w1b_ref, b1_ref,
                          gamma_ref, beta_ref, w2_ref, b2_ref, o_ref,
                          *, negative_slope, ln_eps):
    # Fused concat + linear1 + residual (identity already folded into w1a/w1b):
    #   out = [x1 | x2] + [x1 | x2] @ W1^T + b1 == x1 @ w1a + x2 @ w1b + b1
    # TODO(synk): nn.Dropout is treated as identity (eval mode); training-mode
    # stochastic masking is not implemented.
    out = jnp.dot(x1_ref[...], w1a_ref[...],
                  preferred_element_type=jnp.float32)
    out = out + jnp.dot(x2_ref[...], w1b_ref[...],
                        preferred_element_type=jnp.float32)
    out = out + b1_ref[...]                                # (1, D) broadcast

    # LayerNorm over the feature (lane) axis.
    mean = jnp.mean(out, axis=-1, keepdims=True)
    ctr = out - mean
    var = jnp.mean(ctr * ctr, axis=-1, keepdims=True)
    out = ctr * jax.lax.rsqrt(var + ln_eps)
    out = out * gamma_ref[...] + beta_ref[...]

    # LeakyReLU(negative_slope=0.3)
    out = jnp.where(out >= 0, out, negative_slope * out)

    # linear2 + LeakyReLU
    out = jnp.dot(out, w2_ref[...],
                  preferred_element_type=jnp.float32) + b2_ref[...]
    out = jnp.where(out >= 0, out, negative_slope * out)

    o_ref[...] = out.astype(o_ref.dtype)


def concat_linear(x1, x2, params, *, negative_slope=0.3, ln_eps=1e-5,
                  block_rows=None):
    """Pallas implementation of ConcatLinear.forward(x1, x2) (eval mode)."""
    B, in1 = x1.shape
    B2, in2 = x2.shape
    assert B2 == B
    w1, b1, gamma, beta, w2, b2 = (
        params[k] for k in ("w1", "b1", "gamma", "beta", "w2", "b2"))
    d = in1 + in2
    out_dim = w1.shape[0]
    # The module's residual (src + dropout(linear1(src))) requires this:
    assert out_dim == d and w1.shape == (out_dim, d)
    assert w2.shape == (out_dim, out_dim)

    # Fold the residual identity into W1^T and split per input:
    #   src + src @ W1^T == x1 @ w1a + x2 @ w1b
    w1_eff = w1.T.astype(jnp.float32) + jnp.eye(d, dtype=jnp.float32)
    w1a = w1_eff[:in1]                  # (in1, out_dim)
    w1b = w1_eff[in1:]                  # (in2, out_dim)
    w2_t = w2.T                         # (out_dim, out_dim)

    b1_r = b1.reshape(1, out_dim)
    g_r = gamma.reshape(1, out_dim)
    be_r = beta.reshape(1, out_dim)
    b2_r = b2.reshape(1, out_dim)

    if block_rows is None:
        block_rows = B if B <= 256 else 256
    assert B % block_rows == 0, "batch must be divisible by block_rows"
    grid = (B // block_rows,)

    kernel = functools.partial(_concat_linear_kernel,
                               negative_slope=negative_slope, ln_eps=ln_eps)
    bcast = lambda i: (0, 0)

    return pl.pallas_call(
        kernel,
        out_shape=jax.ShapeDtypeStruct((B, out_dim), x1.dtype),
        grid=grid,
        in_specs=[
            pl.BlockSpec((block_rows, in1), lambda i: (i, 0)),   # x1 row-block
            pl.BlockSpec((block_rows, in2), lambda i: (i, 0)),   # x2 row-block
            pl.BlockSpec((in1, out_dim), bcast),                 # w1a
            pl.BlockSpec((in2, out_dim), bcast),                 # w1b
            pl.BlockSpec((1, out_dim), bcast),                   # b1
            pl.BlockSpec((1, out_dim), bcast),                   # gamma
            pl.BlockSpec((1, out_dim), bcast),                   # beta
            pl.BlockSpec((out_dim, out_dim), bcast),             # w2^T
            pl.BlockSpec((1, out_dim), bcast),                   # b2
        ],
        out_specs=pl.BlockSpec((block_rows, out_dim), lambda i: (i, 0)),
        compiler_params=pltpu.CompilerParams(
            dimension_semantics=("parallel",)),
    )(x1, x2, w1a, w1b, b1_r, g_r, be_r, w2_t, b2_r)


def _concat_linear_ref(x1, x2, params, *, negative_slope=0.3, ln_eps=1e-5):
    """Pure-JAX reference mirroring the PyTorch module (eval mode)."""
    src = jnp.concatenate([x1, x2], axis=-1)
    out = src @ params["w1"].T + params["b1"]
    out = src + out                                   # dropout == identity
    mean = out.mean(-1, keepdims=True)
    var = ((out - mean) ** 2).mean(-1, keepdims=True)
    out = (out - mean) / jnp.sqrt(var + ln_eps)
    out = out * params["gamma"] + params["beta"]
    out = jnp.where(out >= 0, out, negative_slope * out)
    out = out @ params["w2"].T + params["b2"]
    out = jnp.where(out >= 0, out, negative_slope * out)
    return out


if __name__ == "__main__":
    B, in1, in2 = 8, 16, 16
    out_dim = in1 + in2   # the module's residual requires in1 + in2 == out

    key = jax.random.PRNGKey(0)
    ks = jax.random.split(key, 8)
    x1 = jax.random.normal(ks[0], (B, in1), dtype=jnp.float32)
    x2 = jax.random.normal(ks[1], (B, in2), dtype=jnp.float32)
    params = dict(
        w1=0.1 * jax.random.normal(ks[2], (out_dim, in1 + in2), jnp.float32),
        b1=0.1 * jax.random.normal(ks[3], (out_dim,), jnp.float32),
        gamma=1.0 + 0.1 * jax.random.normal(ks[4], (out_dim,), jnp.float32),
        beta=0.1 * jax.random.normal(ks[5], (out_dim,), jnp.float32),
        w2=0.1 * jax.random.normal(ks[6], (out_dim, out_dim), jnp.float32),
        b2=0.1 * jax.random.normal(ks[7], (out_dim,), jnp.float32),
    )

    y = concat_linear(x1, x2, params)
    jax.block_until_ready(y)

    y_ref = _concat_linear_ref(x1, x2, params)
    assert y.shape == (B, out_dim)
    assert jnp.allclose(y, y_ref, rtol=1e-4, atol=1e-5), (y, y_ref)

    print("KERNEL_OK")
</pallas_src>

<mosaic_0001>
module attributes {stable_mosaic.version = 11 : i64} {
  func.func @_concat_linear_kernel(%arg0: i32, %arg1: memref<8x16xf32, #tpu.memory_space<vmem>>, %arg2: memref<8x16xf32, #tpu.memory_space<vmem>>, %arg3: memref<16x32xf32, #tpu.memory_space<vmem>>, %arg4: memref<16x32xf32, #tpu.memory_space<vmem>>, %arg5: memref<1x32xf32, #tpu.memory_space<vmem>>, %arg6: memref<1x32xf32, #tpu.memory_space<vmem>>, %arg7: memref<1x32xf32, #tpu.memory_space<vmem>>, %arg8: memref<32x32xf32, #tpu.memory_space<vmem>>, %arg9: memref<1x32xf32, #tpu.memory_space<vmem>>, %arg10: memref<8x32xf32, #tpu.memory_space<vmem>>) attributes {dimension_semantics = [#tpu.dimension_semantics<parallel>], iteration_bounds = array<i64: 1>, scalar_prefetch = 0 : i64, scratch_operands = 0 : i64, tpu.core_type = #tpu.core_type<tc>, window_params = [{transform_indices = @transform_0, window_bounds = array<i64: 8, 16>}, {transform_indices = @transform_1, window_bounds = array<i64: 8, 16>}, {pipeline_mode = #tpu.pipeline_mode<synchronous>, transform_indices = @transform_2, window_bounds = array<i64: 16, 32>}, {pipeline_mode = #tpu.pipeline_mode<synchronous>, transform_indices = @transform_3, window_bounds = array<i64: 16, 32>}, {pipeline_mode = #tpu.pipeline_mode<synchronous>, transform_indices = @transform_4, window_bounds = array<i64: 1, 32>}, {pipeline_mode = #tpu.pipeline_mode<synchronous>, transform_indices = @transform_5, window_bounds = array<i64: 1, 32>}, {pipeline_mode = #tpu.pipeline_mode<synchronous>, transform_indices = @transform_6, window_bounds = array<i64: 1, 32>}, {pipeline_mode = #tpu.pipeline_mode<synchronous>, transform_indices = @transform_7, window_bounds = array<i64: 32, 32>}, {pipeline_mode = #tpu.pipeline_mode<synchronous>, transform_indices = @transform_8, window_bounds = array<i64: 1, 32>}, {transform_indices = @transform_9, window_bounds = array<i64: 8, 32>}]} {
    %c0 = arith.constant 0 : index
    %c0_0 = arith.constant 0 : index
    %0 = vector.load %arg1[%c0, %c0_0] : memref<8x16xf32, #tpu.memory_space<vmem>>, vector<8x16xf32>
    %c0_1 = arith.constant 0 : index
    %c0_2 = arith.constant 0 : index
    %1 = vector.load %arg3[%c0_1, %c0_2] : memref<16x32xf32, #tpu.memory_space<vmem>>, vector<16x32xf32>
    %cst = arith.constant dense<0.000000e+00> : vector<8x32xf32>
    %2 = tpu.matmul %0, %1, %cst {dimension_numbers = #tpu.dot_dimension_numbers<[1], [0], [0], [1], [0, 0, 1, 1], [], []>} : vector<8x16xf32>, vector<16x32xf32>, vector<8x32xf32> -> vector<8x32xf32>
    %c0_3 = arith.constant 0 : index
    %c0_4 = arith.constant 0 : index
    %3 = vector.load %arg2[%c0_3, %c0_4] : memref<8x16xf32, #tpu.memory_space<vmem>>, vector<8x16xf32>
    %c0_5 = arith.constant 0 : index
    %c0_6 = arith.constant 0 : index
    %4 = vector.load %arg4[%c0_5, %c0_6] : memref<16x32xf32, #tpu.memory_space<vmem>>, vector<16x32xf32>
    %cst_7 = arith.constant dense<0.000000e+00> : vector<8x32xf32>
    %5 = tpu.matmul %3, %4, %cst_7 {dimension_numbers = #tpu.dot_dimension_numbers<[1], [0], [0], [1], [0, 0, 1, 1], [], []>} : vector<8x16xf32>, vector<16x32xf32>, vector<8x32xf32> -> vector<8x32xf32>
    %6 = arith.addf %2, %5 : vector<8x32xf32>
    %c0_8 = arith.constant 0 : index
    %c0_9 = arith.constant 0 : index
    %7 = vector.load %arg5[%c0_8, %c0_9] : memref<1x32xf32, #tpu.memory_space<vmem>>, vector<1x32xf32>
    %8 = vector.broadcast %7 : vector<1x32xf32> to vector<8x32xf32>
    %9 = arith.addf %6, %8 : vector<8x32xf32>
    %cst_10 = arith.constant dense<0.000000e+00> : vector<8xf32>
    %10 = vector.multi_reduction <add>, %9, %cst_10 [1] : vector<8x32xf32> to vector<8xf32>
    %11 = vector.shape_cast %10 : vector<8xf32> to vector<8x1xf32>
    %cst_11 = arith.constant 3.200000e+01 : f32
    %12 = vector.broadcast %cst_11 : f32 to vector<8x1xf32>
    %13 = arith.divf %11, %12 : vector<8x1xf32>
    %14 = vector.broadcast %13 : vector<8x1xf32> to vector<8x32xf32>
    %15 = arith.subf %9, %14 : vector<8x32xf32>
    %16 = arith.mulf %15, %15 : vector<8x32xf32>
    %cst_12 = arith.constant dense<0.000000e+00> : vector<8xf32>
    %17 = vector.multi_reduction <add>, %16, %cst_12 [1] : vector<8x32xf32> to vector<8xf32>
    %18 = vector.shape_cast %17 : vector<8xf32> to vector<8x1xf32>
    %cst_13 = arith.constant 3.200000e+01 : f32
    %19 = vector.broadcast %cst_13 : f32 to vector<8x1xf32>
    %20 = arith.divf %18, %19 : vector<8x1xf32>
    %cst_14 = arith.constant 9.99999974E-6 : f32
    %21 = vector.broadcast %cst_14 : f32 to vector<8x1xf32>
    %22 = arith.addf %20, %21 : vector<8x1xf32>
    %23 = math.rsqrt %22 : vector<8x1xf32>
    %24 = vector.broadcast %23 : vector<8x1xf32> to vector<8x32xf32>
    %25 = arith.mulf %15, %24 : vector<8x32xf32>
    %c0_15 = arith.constant 0 : index
    %c0_16 = arith.constant 0 : index
    %26 = vector.load %arg6[%c0_15, %c0_16] : memref<1x32xf32, #tpu.memory_space<vmem>>, vector<1x32xf32>
    %27 = vector.broadcast %26 : vector<1x32xf32> to vector<8x32xf32>
    %28 = arith.mulf %25, %27 : vector<8x32xf32>
    %c0_17 = arith.constant 0 : index
    %c0_18 = arith.constant 0 : index
    %29 = vector.load %arg7[%c0_17, %c0_18] : memref<1x32xf32, #tpu.memory_space<vmem>>, vector<1x32xf32>
    %30 = vector.broadcast %29 : vector<1x32xf32> to vector<8x32xf32>
    %31 = arith.addf %28, %30 : vector<8x32xf32>
    %cst_19 = arith.constant 0.000000e+00 : f32
    %32 = vector.broadcast %cst_19 : f32 to vector<8x32xf32>
    %33 = arith.cmpf oge, %31, %32 : vector<8x32xf32>
    %cst_20 = arith.constant 3.000000e-01 : f32
    %34 = vector.broadcast %cst_20 : f32 to vector<8x32xf32>
    %35 = arith.mulf %34, %31 : vector<8x32xf32>
    %36 = arith.select %33, %31, %35 : vector<8x32xi1>, vector<8x32xf32>
    %c0_21 = arith.constant 0 : index
    %c0_22 = arith.constant 0 : index
    %37 = vector.load %arg8[%c0_21, %c0_22] : memref<32x32xf32, #tpu.memory_space<vmem>>, vector<32x32xf32>
    %cst_23 = arith.constant dense<0.000000e+00> : vector<8x32xf32>
    %38 = tpu.matmul %36, %37, %cst_23 {dimension_numbers = #tpu.dot_dimension_numbers<[1], [0], [0], [1], [0, 0, 1, 1], [], []>} : vector<8x32xf32>, vector<32x32xf32>, vector<8x32xf32> -> vector<8x32xf32>
    %c0_24 = arith.constant 0 : index
    %c0_25 = arith.constant 0 : index
    %39 = vector.load %arg9[%c0_24, %c0_25] : memref<1x32xf32, #tpu.memory_space<vmem>>, vector<1x32xf32>
    %40 = vector.broadcast %39 : vector<1x32xf32> to vector<8x32xf32>
    %41 = arith.addf %38, %40 : vector<8x32xf32>
    %cst_26 = arith.constant 0.000000e+00 : f32
    %42 = vector.broadcast %cst_26 : f32 to vector<8x32xf32>
    %43 = arith.cmpf oge, %41, %42 : vector<8x32xf32>
    %cst_27 = arith.constant 3.000000e-01 : f32
    %44 = vector.broadcast %cst_27 : f32 to vector<8x32xf32>
    %45 = arith.mulf %44, %41 : vector<8x32xf32>
    %46 = arith.select %43, %41, %45 : vector<8x32xi1>, vector<8x32xf32>
    %c0_28 = arith.constant 0 : index
    %c0_29 = arith.constant 0 : index
    %47 = vector.load %arg10[%c0_28, %c0_29] : memref<8x32xf32, #tpu.memory_space<vmem>>, vector<8x32xf32>
    tpu.vector_store %arg10[%c0_28, %c0_29], %46 {strides = array<i32>} : memref<8x32xf32, #tpu.memory_space<vmem>>, vector<8x32xf32>,
    return
  }
  func.func @transform_0(%arg0: i32) -> (i32, i32) {
    %c0_i32 = arith.constant 0 : i32
    %c0_i32_0 = arith.constant 0 : i32
    return %arg0, %c0_i32 : i32, i32
  }
  func.func @transform_1(%arg0: i32) -> (i32, i32) {
    %c0_i32 = arith.constant 0 : i32
    %c0_i32_0 = arith.constant 0 : i32
    return %arg0, %c0_i32 : i32, i32
  }
  func.func @transform_2(%arg0: i32) -> (i32, i32) {
    %c0_i32 = arith.constant 0 : i32
    %c0_i32_0 = arith.constant 0 : i32
    %c0_i32_1 = arith.constant 0 : i32
    return %c0_i32, %c0_i32_0 : i32, i32
  }
  func.func @transform_3(%arg0: i32) -> (i32, i32) {
    %c0_i32 = arith.constant 0 : i32
    %c0_i32_0 = arith.constant 0 : i32
    %c0_i32_1 = arith.constant 0 : i32
    return %c0_i32, %c0_i32_0 : i32, i32
  }
  func.func @transform_4(%arg0: i32) -> (i32, i32) {
    %c0_i32 = arith.constant 0 : i32
    %c0_i32_0 = arith.constant 0 : i32
    %c0_i32_1 = arith.constant 0 : i32
    return %c0_i32, %c0_i32_0 : i32, i32
  }
  func.func @transform_5(%arg0: i32) -> (i32, i32) {
    %c0_i32 = arith.constant 0 : i32
    %c0_i32_0 = arith.constant 0 : i32
    %c0_i32_1 = arith.constant 0 : i32
    return %c0_i32, %c0_i32_0 : i32, i32
  }
  func.func @transform_6(%arg0: i32) -> (i32, i32) {
    %c0_i32 = arith.constant 0 : i32
    %c0_i32_0 = arith.constant 0 : i32
    %c0_i32_1 = arith.constant 0 : i32
    return %c0_i32, %c0_i32_0 : i32, i32
  }
  func.func @transform_7(%arg0: i32) -> (i32, i32) {
    %c0_i32 = arith.constant 0 : i32
    %c0_i32_0 = arith.constant 0 : i32
    %c0_i32_1 = arith.constant 0 : i32
    return %c0_i32, %c0_i32_0 : i32, i32
  }
  func.func @transform_8(%arg0: i32) -> (i32, i32) {
    %c0_i32 = arith.constant 0 : i32
    %c0_i32_0 = arith.constant 0 : i32
    %c0_i32_1 = arith.constant 0 : i32
    return %c0_i32, %c0_i32_0 : i32, i32
  }
  func.func @transform_9(%arg0: i32) -> (i32, i32) {
    %c0_i32 = arith.constant 0 : i32
    %c0_i32_0 = arith.constant 0 : i32
    return %arg0, %c0_i32 : i32, i32
  }
}

</mosaic_0001>

<llo_original>
// kernel: tpu_custom_call.1
$region0: #{tpu_custom_call.1}
  #allocation0 [shape = 'u32[]', space=smem, size = 0x4, offset = 0x4, fixed_abs, tag = 'smem constant byte address 0x4 - core index']
  #allocation1 [shape = 'u32[144,128]{1,0:T(1,128)}', space=vmem, size = 0x12000, scoped, tag = 'internal scratch']
  %s0 = inlined_call_operand.hbm [shape: f32[8,16], index: 0, kind: input, shape index: {}]
  %s1 = inlined_call_operand.hbm [shape: f32[8,16], index: 1, kind: input, shape index: {}]
  %s2 = inlined_call_operand.hbm [shape: f32[16,32], index: 2, kind: input, shape index: {}]
  %s3 = inlined_call_operand.hbm [shape: f32[16,32], index: 3, kind: input, shape index: {}]
  %s4 = inlined_call_operand.vmem [shape: f32[1,32], index: 4, kind: input, shape index: {}]
  %s5 = inlined_call_operand.vmem [shape: f32[1,32], index: 5, kind: input, shape index: {}]
  %s6 = inlined_call_operand.vmem [shape: f32[1,32], index: 6, kind: input, shape index: {}]
  %s7 = inlined_call_operand.hbm [shape: f32[32,32], index: 7, kind: input, shape index: {}]
  %s8 = inlined_call_operand.vmem [shape: f32[1,32], index: 8, kind: input, shape index: {}]
  %s9 = inlined_call_operand.hbm [shape: f32[8,32], index: 9, kind: output, shape index: {}]
  %s10 = sld [smem:[#allocation0]]
  $region66: #{tpu_custom_call.1} parent=0
    _
  %s12 = ssub.s32 1, %s10
  %s13 = scalar_select 0, %s12, %s10
  $region1: #{tpu_custom_call.1} parent=0
    #allocation2 [shape = 'u8[4096]{0}', space=vmem, size = 0x1000, scoped, tag = 'input window, operand 0, single buffered']
    #allocation3 [shape = 's32[1]{0}', space=sflag, size = 0x4, scoped, tag = 'scoped memory for tpu_custom_call.1']
    #allocation4 [shape = 's32[1]{0}', space=sflag, size = 0x4, scoped, tag = 'scoped memory for tpu_custom_call.1']
    #allocation5 [shape = 'u8[4096]{0}', space=vmem, size = 0x1000, scoped, tag = 'input window, operand 1, single buffered']
    #allocation6 [shape = 's32[1]{0}', space=sflag, size = 0x4, scoped, tag = 'scoped memory for tpu_custom_call.1']
    #allocation7 [shape = 'u8[8192]{0}', space=vmem, size = 0x2000, scoped, tag = 'input window, operand 2, single buffered']
    #allocation8 [shape = 'u8[8192]{0}', space=vmem, size = 0x2000, scoped, tag = 'input window, operand 3, single buffered']
    #allocation9 [shape = 's32[1]{0}', space=sflag, size = 0x4, scoped, tag = 'scoped memory for tpu_custom_call.1']
    #allocation10 [shape = 'u8[16384]{0}', space=vmem, size = 0x4000, scoped, tag = 'input window, operand 7, single buffered']
    #allocation11 [shape = 'u8[4096]{0}', space=vmem, size = 0x1000, scoped, tag = 'output window, operand 0, single buffered']
    %14 = vsyncpa [#allocation3], 0
    %15 = vsyncpa [#allocation6], 0
    %16 = vsyncpa [#allocation9], 0
    %17 = vsyncpa [#allocation4], 0
    // Predicated region
    $region2: #{tpu_custom_call.1} parent=1 // pred_check
      _
    $region3: #{tpu_custom_call.1} parent=1 // pred_check_branch
      %19 = sbr.rel (0) target = $region5
    $region4: #{tpu_custom_call.1} parent=1 // pred_region
      %s21 = ssub.s32 128, 128
      %22 = vsyncadd [#allocation3], %s21
      %s24 = sshll.u32 [#allocation2], 4
      %s25 = int_to_ptr.vmem [resolvable:$true] %s24
      %27 = dma.hbm_to_vmem [thread:$0]  %s0, 128, %s25, [#allocation3]
    $region5: #{tpu_custom_call.1} parent=1 // pred_fallthru
      _
    // Predicated region
    $region6: #{tpu_custom_call.1} parent=1 // pred_check
      _
    $region7: #{tpu_custom_call.1} parent=1 // pred_check_branch
      %29 = sbr.rel (0) target = $region9
    $region8: #{tpu_custom_call.1} parent=1 // pred_region
      %s31 = ssub.s32 128, 128
      %32 = vsyncadd [#allocation6], %s31
      %s34 = sshll.u32 [#allocation5], 4
      %s35 = int_to_ptr.vmem [resolvable:$true] %s34
      %37 = dma.hbm_to_vmem [thread:$0]  %s1, 128, %s35, [#allocation6]
    $region9: #{tpu_custom_call.1} parent=1 // pred_fallthru
      _
    // Predicated region
    $region10: #{tpu_custom_call.1} parent=1 // pred_check
      _
    $region11: #{tpu_custom_call.1} parent=1 // pred_check_branch
      %39 = sbr.rel (0) target = $region13
    $region12: #{tpu_custom_call.1} parent=1 // pred_region
      %s41 = ssub.s32 256, 256
      %42 = vsyncadd [#allocation6], %s41
      %s43 = sshll.u32 [#allocation7], 4
      %s44 = int_to_ptr.vmem [resolvable:$true] %s43
      %49 = dma.hbm_to_vmem [thread:$0]  %s2, 256, %s44, [#allocation6], 128, 128, 8
    $region13: #{tpu_custom_call.1} parent=1 // pred_fallthru
      _
    // Predicated region
    $region14: #{tpu_custom_call.1} parent=1 // pred_check
      _
    $region15: #{tpu_custom_call.1} parent=1 // pred_check_branch
      %51 = sbr.rel (0) target = $region17
    $region16: #{tpu_custom_call.1} parent=1 // pred_region
      %s53 = ssub.s32 256, 256
      %54 = vsyncadd [#allocation9], %s53
      %s55 = sshll.u32 [#allocation8], 4
      %s56 = int_to_ptr.vmem [resolvable:$true] %s55
      %61 = dma.hbm_to_vmem [thread:$0]  %s3, 256, %s56, [#allocation9], 128, 128, 8
    $region17: #{tpu_custom_call.1} parent=1 // pred_fallthru
      _
    // Predicated region
    $region18: #{tpu_custom_call.1} parent=1 // pred_check
      _
    $region19: #{tpu_custom_call.1} parent=1 // pred_check_branch
      %63 = sbr.rel (0) target = $region21
    $region20: #{tpu_custom_call.1} parent=1 // pred_region
      _
    $region21: #{tpu_custom_call.1} parent=1 // pred_fallthru
      _
    // Predicated region
    $region22: #{tpu_custom_call.1} parent=1 // pred_check
      _
    $region23: #{tpu_custom_call.1} parent=1 // pred_check_branch
      %65 = sbr.rel (0) target = $region25
    $region24: #{tpu_custom_call.1} parent=1 // pred_region
      _
    $region25: #{tpu_custom_call.1} parent=1 // pred_fallthru
      _
    // Predicated region
    $region26: #{tpu_custom_call.1} parent=1 // pred_check
      _
    $region27: #{tpu_custom_call.1} parent=1 // pred_check_branch
      %67 = sbr.rel (0) target = $region29
    $region28: #{tpu_custom_call.1} parent=1 // pred_region
      _
    $region29: #{tpu_custom_call.1} parent=1 // pred_fallthru
      _
    // Predicated region
    $region30: #{tpu_custom_call.1} parent=1 // pred_check
      _
    $region31: #{tpu_custom_call.1} parent=1 // pred_check_branch
      %69 = sbr.rel (0) target = $region33
    $region32: #{tpu_custom_call.1} parent=1 // pred_region
      %s71 = ssub.s32 512, 512
      %72 = vsyncadd [#allocation9], %s71
      %s73 = sshll.u32 [#allocation10], 4
      %s74 = int_to_ptr.vmem [resolvable:$true] %s73
      %79 = dma.hbm_to_vmem [thread:$0]  %s7, 512, %s74, [#allocation9], 128, 128, 8
    $region33: #{tpu_custom_call.1} parent=1 // pred_fallthru
      _
    // Predicated region
    $region34: #{tpu_custom_call.1} parent=1 // pred_check
      _
    $region35: #{tpu_custom_call.1} parent=1 // pred_check_branch
      %81 = sbr.rel (0) target = $region37
    $region36: #{tpu_custom_call.1} parent=1 // pred_region
      _
    $region37: #{tpu_custom_call.1} parent=1 // pred_fallthru
      _
    // Predicated region
    $region38: #{tpu_custom_call.1} parent=1 // pred_check
      _
    $region39: #{tpu_custom_call.1} parent=1 // pred_check_branch
      %83 = sbr.rel (0) target = $region41
    $region40: #{tpu_custom_call.1} parent=1 // pred_region
      %84 = dma.done [#allocation3], 128
    $region41: #{tpu_custom_call.1} parent=1 // pred_fallthru
      _
    // Predicated region
    $region42: #{tpu_custom_call.1} parent=1 // pred_check
      _
    $region43: #{tpu_custom_call.1} parent=1 // pred_check_branch
      %86 = sbr.rel (0) target = $region45
    $region44: #{tpu_custom_call.1} parent=1 // pred_region
      %87 = dma.done [#allocation6], 128
    $region45: #{tpu_custom_call.1} parent=1 // pred_fallthru
      _
    // Predicated region
    $region46: #{tpu_custom_call.1} parent=1 // pred_check
      _
    $region47: #{tpu_custom_call.1} parent=1 // pred_check_branch
      %89 = sbr.rel (0) target = $region49
    $region48: #{tpu_custom_call.1} parent=1 // pred_region
      %90 = dma.done [#allocation6], 256
    $region49: #{tpu_custom_call.1} parent=1 // pred_fallthru
      _
    // Predicated region
    $region50: #{tpu_custom_call.1} parent=1 // pred_check
      _
    $region51: #{tpu_custom_call.1} parent=1 // pred_check_branch
      %92 = sbr.rel (0) target = $region53
    $region52: #{tpu_custom_call.1} parent=1 // pred_region
      %93 = dma.done [#allocation9], 256
    $region53: #{tpu_custom_call.1} parent=1 // pred_fallthru
      _
    // Predicated region
    $region54: #{tpu_custom_call.1} parent=1 // pred_check
      _
    $region55: #{tpu_custom_call.1} parent=1 // pred_check_branch
      %95 = sbr.rel (0) target = $region57
    $region56: #{tpu_custom_call.1} parent=1 // pred_region
      %96 = dma.done [#allocation9], 512
    $region57: #{tpu_custom_call.1} parent=1 // pred_fallthru
      _
    %v97 = vld [vmem:[#allocation2] sm:$0xff]
    %v98 = vld [vmem:[#allocation7] sm:$0xff]
    %v99 = vld [vmem:[#allocation7 + $0x8] sm:$0xff]
    %v100 = vld [vmem:[#allocation5] sm:$0xff]
    %v101 = vld [vmem:[#allocation8] sm:$0xff]
    %v102 = vld [vmem:[#allocation8 + $0x8] sm:$0xff]
    %vm103 = vcmask 130048
    %v105 = vsel %vm103, %v100, 0
    %107 = vmatprep.subr.mxu0 0.0
    %108 = vmatpush1.msra.mxu0 %v101
    %109 = vmatprep.subr.mxu0 0.0
    %110 = vmatpush1.msra.mxu0 %v102
    %111 = vmatprep.subr.mxu0 0.0
    %112 = vmatpush1.msra.mxu0 0.0
    %113 = vmatprep.subr.mxu0 0.0
    %114 = vmatpush1.msra.mxu0 0.0
    %115 = vmatprep.subr.mxu0 0.0
    %116 = vmatpush1.msra.mxu0 0.0
    %117 = vmatprep.subr.mxu0 0.0
    %118 = vmatpush1.msra.mxu0 0.0
    %119 = vmatprep.subr.mxu0 0.0
    %120 = vmatpush1.msra.mxu0 0.0
    %121 = vmatprep.subr.mxu0 0.0
    %122 = vmatpush1.msra.mxu0 0.0
    %123 = vmatprep.subr.mxu0 0.0
    %124 = vmatpush1.msra.mxu0 0.0
    %125 = vmatprep.subr.mxu0 0.0
    %126 = vmatpush1.msra.mxu0 0.0
    %127 = vmatprep.subr.mxu0 0.0
    %128 = vmatpush1.msra.mxu0 0.0
    %129 = vmatprep.subr.mxu0 0.0
    %130 = vmatpush1.msra.mxu0 0.0
    %131 = vmatprep.subr.mxu0 0.0
    %132 = vmatpush1.msra.mxu0 0.0
    %133 = vmatprep.subr.mxu0 0.0
    %134 = vmatpush1.msra.mxu0 0.0
    %135 = vmatprep.subr.mxu0 0.0
    %136 = vmatpush1.msra.mxu0 0.0
    %137 = vmatprep.subr.mxu0 0.0
    %138 = vmatpush1.msra.mxu0 0.0
    %139 = vmatprep.subr.mxu0 0.0
    %140 = vmatpush1.msra.mxu0 0.0
    %141 = vmatprep.subr.mxu0 0.0
    %142 = vmatpush1.msra.mxu0 0.0
    %143 = vmatprep.subr.mxu0 0.0
    %144 = vmatpush1.msra.mxu0 0.0
    %145 = vmatprep.subr.mxu0 0.0
    %146 = vmatpush1.msra.mxu0 0.0
    %147 = vmatprep.subr.mxu0 0.0
    %148 = vmatpush1.msra.mxu0 0.0
    %149 = vmatprep.subr.mxu0 0.0
    %150 = vmatpush1.msra.mxu0 0.0
    %151 = vmatprep.subr.mxu0 0.0
    %152 = vmatpush1.msra.mxu0 0.0
    %153 = vmatprep.subr.mxu0 0.0
    %154 = vmatpush1.msra.mxu0 0.0
    %155 = vmatprep.subr.mxu0 0.0
    %156 = vmatpush1.msra.mxu0 0.0
    %157 = vmatprep.subr.mxu0 0.0
    %158 = vmatpush1.msra.mxu0 0.0
    %159 = vmatprep.subr.mxu0 0.0
    %160 = vmatpush1.msra.mxu0 0.0
    %161 = vmatprep.subr.mxu0 0.0
    %162 = vmatpush1.msra.mxu0 0.0
    %163 = vmatprep.subr.mxu0 0.0
    %164 = vmatpush1.msra.mxu0 0.0
    %165 = vmatprep.subr.mxu0 0.0
    %166 = vmatpush1.msra.mxu0 0.0
    %167 = vmatprep.subr.mxu0 0.0
    %168 = vmatpush1.msra.mxu0 0.0
    %169 = vmatprep.subr.mxu0 0.0
    %170 = vmatpush1.msra.mxu0 0.0
    %171 = vmatprep.mubr.f32.mxu0 0.0
    %172 = vmatmul.mubr.f32.gmra.mrb[0].mxu0 %v105
    %v173 = vpop.f32.mrb[0].mxu0
    %v174 = vadd.f32 0.0, %v173
    %v175 = vpop.f32.mrb[0].mxu0
    %176 = vdwg.mxu0
    %v178 = vsel %vm103, %v97, 0
    %180 = vmatprep.subr.mxu0 0.0
    %181 = vmatpush1.msra.mxu0 %v98
    %182 = vmatprep.subr.mxu0 0.0
    %183 = vmatpush1.msra.mxu0 %v99
    %184 = vmatprep.subr.mxu0 0.0
    %185 = vmatpush1.msra.mxu0 0.0
    %186 = vmatprep.subr.mxu0 0.0
    %187 = vmatpush1.msra.mxu0 0.0
    %188 = vmatprep.subr.mxu0 0.0
    %189 = vmatpush1.msra.mxu0 0.0
    %190 = vmatprep.subr.mxu0 0.0
    %191 = vmatpush1.msra.mxu0 0.0
    %192 = vmatprep.subr.mxu0 0.0
    %193 = vmatpush1.msra.mxu0 0.0
    %194 = vmatprep.subr.mxu0 0.0
    %195 = vmatpush1.msra.mxu0 0.0
    %196 = vmatprep.subr.mxu0 0.0
    %197 = vmatpush1.msra.mxu0 0.0
    %198 = vmatprep.subr.mxu0 0.0
    %199 = vmatpush1.msra.mxu0 0.0
    %200 = vmatprep.subr.mxu0 0.0
    %201 = vmatpush1.msra.mxu0 0.0
    %202 = vmatprep.subr.mxu0 0.0
    %203 = vmatpush1.msra.mxu0 0.0
    %204 = vmatprep.subr.mxu0 0.0
    %205 = vmatpush1.msra.mxu0 0.0
    %206 = vmatprep.subr.mxu0 0.0
    %207 = vmatpush1.msra.mxu0 0.0
    %208 = vmatprep.subr.mxu0 0.0
    %209 = vmatpush1.msra.mxu0 0.0
    %210 = vmatprep.subr.mxu0 0.0
    %211 = vmatpush1.msra.mxu0 0.0
    %212 = vmatprep.subr.mxu0 0.0
    %213 = vmatpush1.msra.mxu0 0.0
    %214 = vmatprep.subr.mxu0 0.0
    %215 = vmatpush1.msra.mxu0 0.0
    %216 = vmatprep.subr.mxu0 0.0
    %217 = vmatpush1.msra.mxu0 0.0
    %218 = vmatprep.subr.mxu0 0.0
    %219 = vmatpush1.msra.mxu0 0.0
    %220 = vmatprep.subr.mxu0 0.0
    %221 = vmatpush1.msra.mxu0 0.0
    %222 = vmatprep.subr.mxu0 0.0
    %223 = vmatpush1.msra.mxu0 0.0
    %224 = vmatprep.subr.mxu0 0.0
    %225 = vmatpush1.msra.mxu0 0.0
    %226 = vmatprep.subr.mxu0 0.0
    %227 = vmatpush1.msra.mxu0 0.0
    %228 = vmatprep.subr.mxu0 0.0
    %229 = vmatpush1.msra.mxu0 0.0
    %230 = vmatprep.subr.mxu0 0.0
    %231 = vmatpush1.msra.mxu0 0.0
    %232 = vmatprep.subr.mxu0 0.0
    %233 = vmatpush1.msra.mxu0 0.0
    %234 = vmatprep.subr.mxu0 0.0
    %235 = vmatpush1.msra.mxu0 0.0
    %236 = vmatprep.subr.mxu0 0.0
    %237 = vmatpush1.msra.mxu0 0.0
    %238 = vmatprep.subr.mxu0 0.0
    %239 = vmatpush1.msra.mxu0 0.0
    %240 = vmatprep.subr.mxu0 0.0
    %241 = vmatpush1.msra.mxu0 0.0
    %242 = vmatprep.subr.mxu0 0.0
    %243 = vmatpush1.msra.mxu0 0.0
    %244 = vmatprep.mubr.f32.mxu0 0.0
    %245 = vmatmul.mubr.f32.gmra.mrb[0].mxu0 %v178
    %v246 = vpop.f32.mrb[0].mxu0
    %v247 = vadd.f32 %v174, %v246
    %v248 = vpop.f32.mrb[0].mxu0
    %249 = vdwg.mxu0
    %v250 = vld [vmem:[%s4] sm:$0x1]
    %v252 = vlaneseq
    %v253 = vshrl.u32 %v252, 7
    %v254 = vsub.s32 0, %v253
    %v255 = vrot.slane %v250, %v254
    %v257 = vadd.f32 %v247, %v255
    %vm258 = vcmask 261120
    %v259 = vsel %vm258, %v257, 0.0
    %260 = vadd.xlane.f32.xlu0 %v259
    %v261 = vpop.xlane.xlu0 %260
    %v262 = vrcp.pop 32.0
    %v263 = vmul.f32 %v261, %v262
    %v264 = vsub.f32 %v257, %v263
    %v265 = vmul.f32 %v264, %v264
    %v266 = vsel %vm258, %v265, 0.0
    %267 = vadd.xlane.f32.xlu0 %v266
    %v268 = vpop.xlane.xlu0 %267
    %v269 = vmul.f32 %v268, %v262
    %v270 = vadd.f32 %v269, 1e-05
    %v271 = vrsqrt.pop %v270
    %v272 = vmul.f32 %v264, %v271
    %v273 = vld [vmem:[%s5] sm:$0x1]
    %v275 = vlaneseq
    %v276 = vshrl.u32 %v275, 7
    %v277 = vsub.s32 0, %v276
    %v278 = vrot.slane %v273, %v277
    %v280 = vmul.f32 %v272, %v278
    %v281 = vld [vmem:[%s6] sm:$0x1]
    %v283 = vlaneseq
    %v284 = vshrl.u32 %v283, 7
    %v285 = vsub.s32 0, %v284
    %v286 = vrot.slane %v281, %v285
    %v288 = vadd.f32 %v280, %v286
    %vm289 = vcmp.ge.f32.partialorder %v288, 0.0
    %v290 = vmul.f32 %v288, 0.3
    %v291 = vsel %vm289, %v288, %v290
    %v292 = vld [vmem:[#allocation10] sm:$0xff]
    %v293 = vld [vmem:[#allocation10 + $0x8] sm:$0xff]
    %v294 = vld [vmem:[#allocation10 + $0x10] sm:$0xff]
    %v295 = vld [vmem:[#allocation10 + $0x18] sm:$0xff]
    %v296 = vld [vmem:[%s8] sm:$0x1]
    %v298 = vlaneseq
    %v299 = vshrl.u32 %v298, 7
    %v300 = vsub.s32 0, %v299
    %v301 = vrot.slane %v296, %v300
    %v304 = vsel %vm258, %v291, 0
    %306 = vmatprep.subr.mxu0 0.0
    %307 = vmatpush1.msra.mxu0 %v292
    %308 = vmatprep.subr.mxu0 0.0
    %309 = vmatpush1.msra.mxu0 %v293
    %310 = vmatprep.subr.mxu0 0.0
    %311 = vmatpush1.msra.mxu0 %v294
    %312 = vmatprep.subr.mxu0 0.0
    %313 = vmatpush1.msra.mxu0 %v295
    %314 = vmatprep.subr.mxu0 0.0
    %315 = vmatpush1.msra.mxu0 0.0
    %316 = vmatprep.subr.mxu0 0.0
    %317 = vmatpush1.msra.mxu0 0.0
    %318 = vmatprep.subr.mxu0 0.0
    %319 = vmatpush1.msra.mxu0 0.0
    %320 = vmatprep.subr.mxu0 0.0
    %321 = vmatpush1.msra.mxu0 0.0
    %322 = vmatprep.subr.mxu0 0.0
    %323 = vmatpush1.msra.mxu0 0.0
    %324 = vmatprep.subr.mxu0 0.0
    %325 = vmatpush1.msra.mxu0 0.0
    %326 = vmatprep.subr.mxu0 0.0
    %327 = vmatpush1.msra.mxu0 0.0
    %328 = vmatprep.subr.mxu0 0.0
    %329 = vmatpush1.msra.mxu0 0.0
    %330 = vmatprep.subr.mxu0 0.0
    %331 = vmatpush1.msra.mxu0 0.0
    %332 = vmatprep.subr.mxu0 0.0
    %333 = vmatpush1.msra.mxu0 0.0
    %334 = vmatprep.subr.mxu0 0.0
    %335 = vmatpush1.msra.mxu0 0.0
    %336 = vmatprep.subr.mxu0 0.0
    %337 = vmatpush1.msra.mxu0 0.0
    %338 = vmatprep.subr.mxu0 0.0
    %339 = vmatpush1.msra.mxu0 0.0
    %340 = vmatprep.subr.mxu0 0.0
    %341 = vmatpush1.msra.mxu0 0.0
    %342 = vmatprep.subr.mxu0 0.0
    %343 = vmatpush1.msra.mxu0 0.0
    %344 = vmatprep.subr.mxu0 0.0
    %345 = vmatpush1.msra.mxu0 0.0
    %346 = vmatprep.subr.mxu0 0.0
    %347 = vmatpush1.msra.mxu0 0.0
    %348 = vmatprep.subr.mxu0 0.0
    %349 = vmatpush1.msra.mxu0 0.0
    %350 = vmatprep.subr.mxu0 0.0
    %351 = vmatpush1.msra.mxu0 0.0
    %352 = vmatprep.subr.mxu0 0.0
    %353 = vmatpush1.msra.mxu0 0.0
    %354 = vmatprep.subr.mxu0 0.0
    %355 = vmatpush1.msra.mxu0 0.0
    %356 = vmatprep.subr.mxu0 0.0
    %357 = vmatpush1.msra.mxu0 0.0
    %358 = vmatprep.subr.mxu0 0.0
    %359 = vmatpush1.msra.mxu0 0.0
    %360 = vmatprep.subr.mxu0 0.0
    %361 = vmatpush1.msra.mxu0 0.0
    %362 = vmatprep.subr.mxu0 0.0
    %363 = vmatpush1.msra.mxu0 0.0
    %364 = vmatprep.subr.mxu0 0.0
    %365 = vmatpush1.msra.mxu0 0.0
    %366 = vmatprep.subr.mxu0 0.0
    %367 = vmatpush1.msra.mxu0 0.0
    %368 = vmatprep.subr.mxu0 0.0
    %369 = vmatpush1.msra.mxu0 0.0
    %370 = vmatprep.mubr.f32.mxu0 0.0
    %371 = vmatmul.mubr.f32.gmra.mrb[0].mxu0 %v304
    %v372 = vpop.f32.mrb[0].mxu0
    %v373 = vadd.f32 %v301, %v372
    %v374 = vpop.f32.mrb[0].mxu0
    %375 = vdwg.mxu0
    %vm376 = vcmp.ge.f32.partialorder %v373, 0.0
    %v377 = vmul.f32 %v373, 0.3
    %v378 = vsel %vm376, %v373, %v377
    %379 = vst.msk [vmem:[#allocation11] sm:$0xff] %vm258, %v378
    // Predicated region
    $region58: #{tpu_custom_call.1} parent=1 // pred_check
      _
    $region59: #{tpu_custom_call.1} parent=1 // pred_check_branch
      %381 = sbr.rel (0) target = $region61
    $region60: #{tpu_custom_call.1} parent=1 // pred_region
      %s383 = ssub.s32 128, 128
      %384 = vsyncadd [#allocation4], %s383
      %s386 = sshll.u32 [#allocation11], 4
      %s387 = int_to_ptr.vmem [resolvable:$true] %s386
      %389 = dma.vmem_to_hbm [thread:$0]  %s387, 128, %s9, [#allocation4]
    $region61: #{tpu_custom_call.1} parent=1 // pred_fallthru
      _
    // Predicated region
    $region62: #{tpu_custom_call.1} parent=1 // pred_check
      _
    $region63: #{tpu_custom_call.1} parent=1 // pred_check_branch
      %391 = sbr.rel (0) target = $region65
    $region64: #{tpu_custom_call.1} parent=1 // pred_region
      %392 = dma.done [#allocation4], 128
    $region65: #{tpu_custom_call.1} parent=1 // pred_fallthru
      _
    %393 = vsyncpa [#allocation3], 1
    %394 = vsyncpa [#allocation6], 1
    %395 = vsyncpa [#allocation9], 1
    %396 = vsyncpa [#allocation4], 1

</llo_original>
